<compile_context>
chip_gen: v7x
topology: tpu7x:2x2x1
jax: 0.10.0
libtpu: 0.0.40
codegen_flags: <defaults>
</compile_context>

<pallas_src>
import functools

import jax
import jax.numpy as jnp
from jax.experimental import pallas as pl
from jax.experimental.pallas import tpu as pltpu


def _round_up(x, m):
    return (x + m - 1) // m * m


def _mlloss_sim_kernel(real_ref, fake_ref, o_ref, *, tm, tk, half, d,
                       mask_rows, mask_cols):
    """Accumulate sum(real_tile * fake_tile) into a per-row-tile SMEM scalar."""
    k = pl.program_id(1)   # feature (reduction) axis -- innermost / 'arbitrary'

    @pl.when(k == 0)
    def _():
        o_ref[0, 0] = jnp.float32(0.0)

    # Upcast before the multiply: free (DMA-bound), and keeps bf16/fp8 inputs
    # numerically aligned with an f32-accumulating reference.
    prod = real_ref[...].astype(jnp.float32) * fake_ref[...].astype(jnp.float32)

    # Mask out-of-bounds rows / features of partial edge tiles (their VMEM
    # contents are unspecified).  Only emitted when a remainder exists.
    if mask_rows or mask_cols:
        i = pl.program_id(0)
        valid = None
        if mask_rows:
            rows = jax.lax.broadcasted_iota(jnp.int32, (tm, tk), 0) + i * tm
            valid = rows < half
        if mask_cols:
            cols = jax.lax.broadcasted_iota(jnp.int32, (tm, tk), 1) + k * tk
            cvalid = cols < d
            valid = cvalid if valid is None else (valid & cvalid)
        prod = jnp.where(valid, prod, 0.0)

    o_ref[0, 0] += jnp.sum(prod)


_SUBLANE_MIN = {4: 8, 2: 16, 1: 32}   # min second-minor tile per itemsize


def _choose_tiles(half, d, itemsize, tm, tk):
    sub = _SUBLANE_MIN.get(itemsize, 8)

    # Row tile: multiple of the dtype's minimum sublane tile; cap at ~half/2 so
    # the 'parallel' row axis has >= 2 steps (v7x megacore); a full-row-extent
    # block is used when half is too small to split (always a legal shape).
    tm = _round_up(max(int(tm), sub), sub)
    if half > sub:
        tm = min(tm, _round_up((half + 1) // 2, sub))
    if tm >= half:
        tm = half

    # Feature tile: default to ~4 MiB per input per step, multiple of 128,
    # clamped so 2 inputs x 2 pipeline buffers stay under ~36 MiB of VMEM
    # (safe on v5e/v6e/v7x); a full-feature-extent block is always legal.
    if tk is None:
        tk = max(2048, (4 * 1024 * 1024) // (tm * itemsize))
    tk = _round_up(max(int(tk), 128), 128)
    budget = 36 * 1024 * 1024          # 2 inputs x 2 buffers x tm x tk x isz
    while 4 * tm * tk * itemsize > budget and tk > 128:
        tk = _round_up(tk // 2, 128)
    if tk >= d:
        tk = d
    return tm, tk


def mlloss_sim(x, *, tm=512, tk=None, min_pallas_elements=1 << 21):
    """x: (B, D) array, B even. Returns scalar float32 loss."""
    b, d = x.shape
    assert b % 2 == 0 and b >= 2, "batch must be even"
    half = b // 2

    # Tiny-shape fallback: the fixed Pallas per-step / launch overhead would
    # dominate; a fused XLA reduction is strictly faster there.
    if half * d < min_pallas_elements:
        real = x[:half].astype(jnp.float32)
        fake = x[half:].astype(jnp.float32)
        return (0.5 + jnp.vdot(real.ravel(), fake.ravel()) / jnp.float32(b)
                ).astype(jnp.float32)

    itemsize = jnp.dtype(x.dtype).itemsize
    tm, tk = _choose_tiles(half, d, itemsize, tm, tk)
    nrt, nkt = pl.cdiv(half, tm), pl.cdiv(d, tk)
    mask_rows = (half % tm) != 0
    mask_cols = (d % tk) != 0

    # Free, contiguous view: slab 0 is 'real', slab 1 is 'fake'.  Passing the
    # same array twice keeps both halves zero-copy (no pad / slice in HBM).
    x3 = x.reshape(2, half, d)

    kernel = functools.partial(
        _mlloss_sim_kernel, tm=tm, tk=tk, half=half, d=d,
        mask_rows=mask_rows, mask_cols=mask_cols)

    partials = pl.pallas_call(
        kernel,
        out_shape=jax.ShapeDtypeStruct((nrt, 1), jnp.float32),
        grid_spec=pltpu.PrefetchScalarGridSpec(
            num_scalar_prefetch=0,
            grid=(nrt, nkt),                      # reduction (feature) axis last
            in_specs=[
                pl.BlockSpec((None, tm, tk), lambda i, k: (0, i, k)),  # real
                pl.BlockSpec((None, tm, tk), lambda i, k: (1, i, k)),  # fake
            ],
            # Per-row-tile scalar partial sums in SMEM: no masked vector
            # stores, and the row axis stays 'parallel' for v7x megacore.
            out_specs=pl.BlockSpec((1, 1), lambda i, k: (i, 0),
                                   memory_space=pltpu.MemorySpace.SMEM),
        ),
        compiler_params=pltpu.CompilerParams(
            dimension_semantics=("parallel", "arbitrary"),
            vmem_limit_bytes=48 * 1024 * 1024,
        ),
        cost_estimate=pl.CostEstimate(
            flops=2 * half * d,                   # one mul + one add per element
            transcendentals=0,
            bytes_accessed=b * d * itemsize + nrt * 4,
        ),
    )(x3, x3)

    # loss = mean((sim + 1) / 2) = 0.5 + sum(real * fake) / b
    return (0.5 + jnp.sum(partials) / jnp.float32(b)).astype(jnp.float32)


def mlloss_sim_ref(x):
    """Pure-JAX reference mirroring the PyTorch module."""
    b = x.shape[0]
    real, fake = x[: b // 2], x[b // 2:]
    sim = jnp.diag(jnp.matmul(real, fake.T, precision=jax.lax.Precision.HIGHEST))
    return jnp.mean((sim + 1.0) / 2.0)


if __name__ == "__main__":
    key = jax.random.PRNGKey(0)

    # Test 1: small shape via the default path (tiny-input XLA fallback).
    x1 = jax.random.normal(key, (8, 32), dtype=jnp.float32)
    loss1 = jax.block_until_ready(mlloss_sim(x1))
    ref1 = jax.block_until_ready(mlloss_sim_ref(x1))
    assert jnp.allclose(loss1, ref1, atol=1e-5, rtol=1e-5), (loss1, ref1)

    # Test 2: force the Pallas path at the same tiny shape -> single
    # full-extent block (tm=half=4, tk=d=32), no masking.
    loss2 = jax.block_until_ready(mlloss_sim(x1, min_pallas_elements=0))
    assert jnp.allclose(loss2, ref1, atol=1e-5, rtol=1e-5), (loss2, ref1)

    # Test 3: ragged shape, small tiles -> 3x2 grid with zero-copy halves and
    # in-kernel row + feature masking of the partial edge tiles.
    x3 = jax.random.normal(key, (40, 200), dtype=jnp.float32)
    loss3 = jax.block_until_ready(
        mlloss_sim(x3, tm=8, tk=128, min_pallas_elements=0))
    ref3 = jax.block_until_ready(mlloss_sim_ref(x3))
    assert jnp.allclose(loss3, ref3, atol=1e-5, rtol=1e-5), (loss3, ref3)

    # Test 4: bf16 input -> dtype-aware sublane tile (16), 2 row tiles on the
    # 'parallel' axis (megacore), ragged row mask, f32 upcast before multiply.
    x4 = jax.random.normal(key, (48, 384), dtype=jnp.bfloat16)
    loss4 = jax.block_until_ready(mlloss_sim(x4, min_pallas_elements=0))
    ref4 = jax.block_until_ready(mlloss_sim_ref(x4.astype(jnp.float32)))
    assert jnp.allclose(loss4, ref4, atol=1e-4, rtol=1e-4), (loss4, ref4)

    print("KERNEL_OK")
</pallas_src>

<mosaic_0001>
module attributes {stable_mosaic.version = 11 : i64} {
  func.func @_mlloss_sim_kernel(%arg0: i32, %arg1: i32, %arg2: memref<1x4x32xf32, #tpu.memory_space<vmem>>, %arg3: memref<1x4x32xf32, #tpu.memory_space<vmem>>, %arg4: memref<1x1xf32, #tpu.memory_space<smem>>) attributes {dimension_semantics = [#tpu.dimension_semantics<parallel>, #tpu.dimension_semantics<arbitrary>], iteration_bounds = array<i64: 1, 1>, scalar_prefetch = 0 : i64, scratch_operands = 0 : i64, tpu.core_type = #tpu.core_type<tc>, window_params = [{transform_indices = @transform_0, window_bounds = array<i64: 1, 4, 32>}, {transform_indices = @transform_1, window_bounds = array<i64: 1, 4, 32>}, {transform_indices = @transform_2, window_bounds = array<i64: 1, 1>}]} {
    %c0_i32 = arith.constant 0 : i32
    %0 = arith.cmpi eq, %arg1, %c0_i32 : i32
    %1 = arith.extui %0 : i1 to i32
    %c0_i32_0 = arith.constant 0 : i32
    %2 = arith.cmpi ne, %1, %c0_i32_0 : i32
    scf.if %2 {
      %cst_10 = arith.constant 0.000000e+00 : f32
      %c0_11 = arith.constant 0 : index
      %c0_12 = arith.constant 0 : index
      %15 = memref.load %arg4[%c0_11, %c0_12] : memref<1x1xf32, #tpu.memory_space<smem>>
      memref.store %cst_10, %arg4[%c0_11, %c0_12] : memref<1x1xf32, #tpu.memory_space<smem>>
    } else {
    }
    %c0 = arith.constant 0 : index
    %c0_1 = arith.constant 0 : index
    %c0_2 = arith.constant 0 : index
    %3 = vector.load %arg2[%c0, %c0_1, %c0_2] : memref<1x4x32xf32, #tpu.memory_space<vmem>>, vector<1x4x32xf32>
    %4 = vector.shape_cast %3 : vector<1x4x32xf32> to vector<4x32xf32>
    %c0_3 = arith.constant 0 : index
    %c0_4 = arith.constant 0 : index
    %c0_5 = arith.constant 0 : index
    %5 = vector.load %arg3[%c0_3, %c0_4, %c0_5] : memref<1x4x32xf32, #tpu.memory_space<vmem>>, vector<1x4x32xf32>
    %6 = vector.shape_cast %5 : vector<1x4x32xf32> to vector<4x32xf32>
    %7 = arith.mulf %4, %6 : vector<4x32xf32>
    %c0_6 = arith.constant 0 : index
    %c0_7 = arith.constant 0 : index
    %8 = memref.load %arg4[%c0_6, %c0_7] : memref<1x1xf32, #tpu.memory_space<smem>>
    %9 = vector.shape_cast %7 : vector<4x32xf32> to vector<1x4x32xf32>
    %cst = arith.constant dense<0.000000e+00> : vector<1xf32>
    %10 = vector.multi_reduction <add>, %9, %cst [1, 2] : vector<1x4x32xf32> to vector<1xf32>
    %11 = vector.shape_cast %10 : vector<1xf32> to vector<1x1x1xf32>
    %12 = vector.extract %11[0, 0, 0] : f32 from vector<1x1x1xf32>
    %13 = arith.addf %8, %12 : f32
    %c0_8 = arith.constant 0 : index
    %c0_9 = arith.constant 0 : index
    %14 = memref.load %arg4[%c0_8, %c0_9] : memref<1x1xf32, #tpu.memory_space<smem>>
    memref.store %13, %arg4[%c0_8, %c0_9] : memref<1x1xf32, #tpu.memory_space<smem>>
    return
  }
  func.func @transform_0(%arg0: i32, %arg1: i32) -> (i32, i32, i32) {
    %c0_i32 = arith.constant 0 : i32
    %c0_i32_0 = arith.constant 0 : i32
    return %c0_i32, %arg0, %arg1 : i32, i32, i32
  }
  func.func @transform_1(%arg0: i32, %arg1: i32) -> (i32, i32, i32) {
    %c1_i32 = arith.constant 1 : i32
    %c0_i32 = arith.constant 0 : i32
    return %c1_i32, %arg0, %arg1 : i32, i32, i32
  }
  func.func @transform_2(%arg0: i32, %arg1: i32) -> (i32, i32) {
    %c0_i32 = arith.constant 0 : i32
    %c0_i32_0 = arith.constant 0 : i32
    return %arg0, %c0_i32 : i32, i32
  }
}

</mosaic_0001>

<llo_original>
// kernel: tpu_custom_call.1
$region0: #{tpu_custom_call.1}
  #allocation0 [shape = 'u32[]', space=smem, size = 0x4, offset = 0x4, fixed_abs, tag = 'smem constant byte address 0x4 - core index']
  #allocation1 [shape = 'u32[144,128]{1,0:T(1,128)}', space=vmem, size = 0x12000, scoped, tag = 'internal scratch']
  %s0 = inlined_call_operand.hbm [shape: f32[2,4,32], index: 0, kind: input, shape index: {}]
  %s1 = inlined_call_operand.hbm [shape: f32[2,4,32], index: 1, kind: input, shape index: {}]
  %s2 = inlined_call_operand.hbm [shape: f32[1,1], index: 2, kind: output, shape index: {}]
  %s3 = sld [smem:[#allocation0]]
  $region30: #{tpu_custom_call.1} parent=0
    _
  %s5 = ssub.s32 1, %s3
  %s6 = scalar_select 0, %s5, %s3
  $region1: #{tpu_custom_call.1} parent=0
    #allocation2 [shape = 'u8[2048]{0}', space=vmem, size = 0x800, scoped, tag = 'input window, operand 0, single buffered']
    #allocation3 [shape = 's32[1]{0}', space=sflag, size = 0x4, scoped, tag = 'scoped memory for tpu_custom_call.1']
    #allocation4 [shape = 's32[1]{0}', space=sflag, size = 0x4, scoped, tag = 'scoped memory for tpu_custom_call.1']
    #allocation5 [shape = 'u8[2048]{0}', space=vmem, size = 0x800, scoped, tag = 'input window, operand 1, single buffered']
    #allocation6 [shape = 's32[1]{0}', space=sflag, size = 0x4, scoped, tag = 'scoped memory for tpu_custom_call.1']
    #allocation7 [shape = 'u8[512]{0}', space=smem, size = 0x200, scoped, tag = 'output window, operand 0, single buffered']
    %7 = vsyncpa [#allocation3], 0
    %8 = vsyncpa [#allocation6], 0
    %9 = vsyncpa [#allocation4], 0
    // Predicated region
    $region2: #{tpu_custom_call.1} parent=1 // pred_check
      _
    $region3: #{tpu_custom_call.1} parent=1 // pred_check_branch
      %11 = sbr.rel (0) target = $region5
    $region4: #{tpu_custom_call.1} parent=1 // pred_region
      %s13 = ssub.s32 64, 64
      %14 = vsyncadd [#allocation3], %s13
      %s16 = sshll.u32 [#allocation2], 4
      %s17 = int_to_ptr.vmem [resolvable:$true] %s16
      %19 = dma.hbm_to_vmem [thread:$0]  %s0, 64, %s17, [#allocation3]
    $region5: #{tpu_custom_call.1} parent=1 // pred_fallthru
      _
    // Predicated region
    $region6: #{tpu_custom_call.1} parent=1 // pred_check
      _
    $region7: #{tpu_custom_call.1} parent=1 // pred_check_branch
      %21 = sbr.rel (0) target = $region9
    $region8: #{tpu_custom_call.1} parent=1 // pred_region
      %s23 = ssub.s32 64, 64
      %24 = vsyncadd [#allocation6], %s23
      %s25 = scalar_lea.hbm %s1, 64
      %s27 = sshll.u32 [#allocation5], 4
      %s28 = int_to_ptr.vmem [resolvable:$true] %s27
      %30 = dma.hbm_to_vmem [thread:$0]  %s25, 64, %s28, [#allocation6]
    $region9: #{tpu_custom_call.1} parent=1 // pred_fallthru
      _
    // Predicated region
    $region10: #{tpu_custom_call.1} parent=1 // pred_check
      _
    $region11: #{tpu_custom_call.1} parent=1 // pred_check_branch
      %32 = sbr.rel (0) target = $region13
    $region12: #{tpu_custom_call.1} parent=1 // pred_region
      %33 = dma.done [#allocation3], 64
    $region13: #{tpu_custom_call.1} parent=1 // pred_fallthru
      _
    // Predicated region
    $region14: #{tpu_custom_call.1} parent=1 // pred_check
      _
    $region15: #{tpu_custom_call.1} parent=1 // pred_check_branch
      %35 = sbr.rel (0) target = $region17
    $region16: #{tpu_custom_call.1} parent=1 // pred_region
      %36 = dma.done [#allocation6], 64
    $region17: #{tpu_custom_call.1} parent=1 // pred_fallthru
      _
    %p37 = scmp.eq.s32.totalorder 0, 0
    // Predicated region
    $region18: #{tpu_custom_call.1} parent=1 // pred_check
      %p38 = pneg %p37
    $region19: #{tpu_custom_call.1} parent=1 // pred_check_branch
      %40 = sbr.rel (%p38) target = $region21
    $region20: #{tpu_custom_call.1} parent=1 // pred_region
      %s41 = scalar_lea.smem [#allocation7], 0
      %42 = sst [smem:[%s41]] 0.0
    $region21: #{tpu_custom_call.1} parent=1 // pred_fallthru
      _
    %v43 = vld [vmem:[#allocation2] sm:$0xf]
    %v44 = vld [vmem:[#allocation5] sm:$0xf]
    %v45 = vmul.f32 %v43, %v44
    %s46 = sld [smem:[#allocation7]]
    %vm47 = vcmask 257024
    %v48 = vsel %vm47, %v45, 0.0
    %49 = vadd.xlane.f32.xlu0 %v48
    %v50 = vpop.xlane.xlu0 %49
    %v51 = vrot.slane %v50, 4
    %v52 = vadd.f32 %v50, %v51
    %v53 = vrot.slane %v52, 2
    %v54 = vadd.f32 %v52, %v53
    %v55 = vrot.slane %v54, 1
    %v56 = vadd.f32 %v54, %v55
    %s57 = vtos %v56
    %s58 = sadd.f32 %s46, %s57
    %s59 = scalar_lea.smem [#allocation7], 0
    %60 = sst [smem:[%s59]] %s58
    // Predicated region
    $region22: #{tpu_custom_call.1} parent=1 // pred_check
      _
    $region23: #{tpu_custom_call.1} parent=1 // pred_check_branch
      %62 = sbr.rel (0) target = $region25
    $region24: #{tpu_custom_call.1} parent=1 // pred_region
      %s64 = ssub.s32 16, 16
      %65 = vsyncadd [#allocation4], %s64
      %68 = dma.smem_to_hbm [#allocation7], 16, %s2, [#allocation4]
    $region25: #{tpu_custom_call.1} parent=1 // pred_fallthru
      _
    // Predicated region
    $region26: #{tpu_custom_call.1} parent=1 // pred_check
      _
    $region27: #{tpu_custom_call.1} parent=1 // pred_check_branch
      %70 = sbr.rel (0) target = $region29
    $region28: #{tpu_custom_call.1} parent=1 // pred_region
      %71 = dma.done [#allocation4], 16
    $region29: #{tpu_custom_call.1} parent=1 // pred_fallthru
      _
    %72 = sfence
    %73 = vsyncpa [#allocation3], 1
    %74 = vsyncpa [#allocation6], 1
    %75 = vsyncpa [#allocation4], 1

</llo_original>
